<compile_context>
chip_gen: v6e
topology: v6e:2x2x1
jax: 0.10.0
libtpu: 0.0.40
codegen_flags: <defaults>
</compile_context>

<pallas_src>
import functools

import jax
import jax.numpy as jnp
from jax.experimental import pallas as pl
from jax.experimental.pallas import tpu as pltpu


def _dwconv_kernel(x_ref, w_ref, o_ref, xpad_ref, *, ksize, pad):
    """One (batch, channel-tile) block of a depthwise KxK conv (NHWC, C on lanes).

    x_ref:    (1, H, W, Ct)             unpadded input tile (model dtype)
    w_ref:    (K*K, Ct)                 per-tap, lane-dense weights
    o_ref:    (1, Ho, Wo, Ct)           output tile
    xpad_ref: (1, H+2p, W+2p, Ct) VMEM  zero-halo scratch (built in-kernel)
    """
    H, W = x_ref.shape[1], x_ref.shape[2]
    Ho, Wo = o_ref.shape[1], o_ref.shape[2]
    Hp, Wp = H + 2 * pad, W + 2 * pad
    Ct = xpad_ref.shape[3]
    dt = xpad_ref.dtype

    # Zero only the halo strips; the interior is fully overwritten by x below.
    if pad > 0:
        xpad_ref[:, 0:pad, :, :] = jnp.zeros((1, pad, Wp, Ct), dt)          # top
        xpad_ref[:, pad + H:Hp, :, :] = jnp.zeros((1, pad, Wp, Ct), dt)     # bottom
        xpad_ref[:, pad:pad + H, 0:pad, :] = jnp.zeros((1, H, pad, Ct), dt)  # left
        xpad_ref[:, pad:pad + H, pad + W:Wp, :] = jnp.zeros((1, H, pad, Ct), dt)  # right
    xpad_ref[:, pad:pad + H, pad:pad + W, :] = x_ref[...]

    # Hoist weight load + cast out of the tap loop: (K*K, Ct) lane-dense rows.
    w_all = w_ref[...].astype(jnp.float32)

    # Accumulate all taps in a local value; tap 0 initializes the accumulator
    # (no zero pass, no RMW through a scratch ref, a single final store).
    # kj (W = sublane axis) is the outer loop: only K sublane-offset slices of
    # the padded tile are taken instead of K*K.
    acc = None
    for kj in range(ksize):
        x_kj = xpad_ref[:, :, kj:kj + Wo, :].astype(jnp.float32)   # (1, Hp, Wo, Ct)
        for ki in range(ksize):
            t = ki * ksize + kj
            x_tap = x_kj[:, ki:ki + Ho, :, :]                      # cheap H slice
            w_tap = w_all[t].reshape(1, 1, 1, -1)                  # bcast over H, W
            term = x_tap * w_tap
            acc = term if acc is None else acc + term

    o_ref[...] = acc.astype(o_ref.dtype)


def _vmem_budgets():
    """(per-block budget, scoped vmem limit) — generation aware.

    v7x has 64 MiB VMEM per TensorCore, v5e/v6e have 128 MiB.
    """
    try:
        cap = pltpu.get_tpu_info().vmem_capacity_bytes
    except Exception:  # pragma: no cover - info unavailable, assume 128 MiB
        cap = 128 * 1024 * 1024
    if cap <= 64 * 1024 * 1024:          # v7x-class
        return 8 * 1024 * 1024, 36 * 1024 * 1024
    return 28 * 1024 * 1024, 64 * 1024 * 1024   # v5e / v6e


def _pick_c_tile(C, H, W, Hp, Wp, Ho, Wo, itemsize, budget_bytes):
    """Largest lane-aligned channel tile whose per-block VMEM footprint fits."""

    def block_bytes(ct):
        b = 2 * H * W * ct * itemsize        # input block (double-buffered)
        b += 2 * Ho * Wo * ct * itemsize     # output block (double-buffered)
        b += Hp * Wp * ct * itemsize         # zero-halo scratch
        b += Ho * Wo * ct * 4                # f32 accumulator (compiler temp)
        b += Hp * Wo * ct * 4                # f32 per-kj tap slab (compiler temp)
        return b

    for cand in (2048, 1024, 512, 256, 128):
        if C % cand == 0 and block_bytes(cand) <= budget_bytes:
            return cand
    # C is always padded to a multiple of 128 by the wrapper.
    # TODO(synk): add an H-tile grid axis instead of over-budget 128-wide tiles
    # for very large feature maps.
    return 128


def depthwise_conv2d(x, weight, *, kernel_size=3, stride=1, padding=1,
                     data_format="NCHW"):
    """Depthwise conv matching nn.Conv2d(C_in, C_out, K, groups=C_in, bias=False).

    x:      (N, C_in, H, W) if data_format == "NCHW" (PyTorch layout), or
            (N, H, W, C_in) if data_format == "NHWC" (skips wrapper transposes).
    weight: (C_out, 1, K, K)  PyTorch grouped-conv layout, C_out = m * C_in
    """
    assert stride == 1, "only stride=1 implemented"  # TODO(synk): strided output slicing
    K = kernel_size

    if data_format == "NCHW":
        N, C_in, H, W = x.shape
        # TODO(synk): keep surrounding model activations NHWC (data_format="NHWC")
        # to drop this transpose pair and its extra HBM read+write passes.
        x_nhwc = jnp.transpose(x, (0, 2, 3, 1))                   # (N, H, W, C_in)
    elif data_format == "NHWC":
        N, H, W, C_in = x.shape
        x_nhwc = x
    else:
        raise ValueError(f"unknown data_format {data_format!r}")

    C_out = weight.shape[0]
    assert weight.shape == (C_out, 1, K, K)
    assert C_out % C_in == 0
    m = C_out // C_in

    Hp, Wp = H + 2 * padding, W + 2 * padding
    Ho, Wo = Hp - K + 1, Wp - K + 1

    if m > 1:
        # TODO(synk): express the depth-multiplier via the channel index_map
        # (input tile c // m) instead of materializing an m-times copy in HBM.
        x_nhwc = jnp.repeat(x_nhwc, m, axis=3)                    # (N, H, W, C_out)

    # Weights as (K*K, C_out): each tap is one lane-dense row.
    w_taps = jnp.transpose(weight.reshape(C_out, K * K), (1, 0))  # (K*K, C_out)

    # Keep the lane (last) dim a multiple of 128 so every load/store is
    # lane-dense (no masked vst.msk partial stores on the output).
    C_pad = ((C_out + 127) // 128) * 128
    if C_pad != C_out:
        x_nhwc = jnp.pad(x_nhwc, ((0, 0), (0, 0), (0, 0), (0, C_pad - C_out)))
        w_taps = jnp.pad(w_taps, ((0, 0), (0, C_pad - C_out)))

    budget_bytes, vmem_limit = _vmem_budgets()
    c_tile = _pick_c_tile(C_pad, H, W, Hp, Wp, Ho, Wo,
                          x.dtype.itemsize, budget_bytes)
    n_ctiles = C_pad // c_tile

    kernel = functools.partial(_dwconv_kernel, ksize=K, pad=padding)

    out_nhwc = pl.pallas_call(
        kernel,
        out_shape=jax.ShapeDtypeStruct((N, Ho, Wo, C_pad), x.dtype),
        grid_spec=pltpu.PrefetchScalarGridSpec(
            num_scalar_prefetch=0,
            # TODO(synk): add an H-tile "parallel" axis (overlapping halo rows)
            # for large feature maps / better 2-TC balance on v7x.
            grid=(N, n_ctiles),
            in_specs=[
                pl.BlockSpec((1, H, W, c_tile), lambda n, c: (n, 0, 0, c)),
                pl.BlockSpec((K * K, c_tile), lambda n, c: (0, c)),
            ],
            out_specs=pl.BlockSpec((1, Ho, Wo, c_tile),
                                   lambda n, c: (n, 0, 0, c)),
            scratch_shapes=[
                pltpu.VMEM((1, Hp, Wp, c_tile), x.dtype),   # zero-halo scratch
            ],
        ),
        compiler_params=pltpu.CompilerParams(
            dimension_semantics=("parallel", "parallel"),
            vmem_limit_bytes=vmem_limit,
        ),
    )(x_nhwc, w_taps)

    if C_pad != C_out:
        out_nhwc = out_nhwc[..., :C_out]

    if data_format == "NCHW":
        return jnp.transpose(out_nhwc, (0, 3, 1, 2))              # back to NCHW
    return out_nhwc


if __name__ == "__main__":
    key = jax.random.PRNGKey(0)
    kx, kw = jax.random.split(key)

    N, C_in, H, W = 2, 4, 16, 16
    C_out = C_in          # in_planes == out_planes (typical dfresnet usage)
    K = 3

    x = jax.random.normal(kx, (N, C_in, H, W), dtype=jnp.float32)
    weight = jax.random.normal(kw, (C_out, 1, K, K), dtype=jnp.float32)

    # Reference: XLA grouped conv (same semantics as the PyTorch module).
    ref = jax.lax.conv_general_dilated(
        x, weight,
        window_strides=(1, 1),
        padding=((1, 1), (1, 1)),
        dimension_numbers=("NCHW", "OIHW", "NCHW"),
        feature_group_count=C_in,
    )

    # NCHW (PyTorch-layout) path.
    out = depthwise_conv2d(x, weight, kernel_size=K, stride=1, padding=1)
    out = jax.block_until_ready(out)
    assert out.shape == (N, C_out, H, W), out.shape
    assert jnp.allclose(out, ref, atol=1e-4, rtol=1e-4)

    # Channels-last fast path (no wrapper transposes).
    x_nhwc = jnp.transpose(x, (0, 2, 3, 1))
    out_nhwc = depthwise_conv2d(x_nhwc, weight, kernel_size=K, stride=1,
                                padding=1, data_format="NHWC")
    out_nhwc = jax.block_until_ready(out_nhwc)
    assert jnp.allclose(jnp.transpose(out_nhwc, (0, 3, 1, 2)), ref,
                        atol=1e-4, rtol=1e-4)

    print("KERNEL_OK")
</pallas_src>

<mosaic_0001>
module attributes {stable_mosaic.version = 11 : i64} {
  func.func @_dwconv_kernel(%arg0: i32, %arg1: i32, %arg2: memref<1x16x16x128xf32, #tpu.memory_space<vmem>>, %arg3: memref<9x128xf32, #tpu.memory_space<vmem>>, %arg4: memref<1x16x16x128xf32, #tpu.memory_space<vmem>>, %arg5: memref<1x18x18x128xf32, #tpu.memory_space<vmem>>) attributes {dimension_semantics = [#tpu.dimension_semantics<parallel>, #tpu.dimension_semantics<parallel>], iteration_bounds = array<i64: 2, 1>, scalar_prefetch = 0 : i64, scratch_operands = 1 : i64, tpu.core_type = #tpu.core_type<tc>, window_params = [{transform_indices = @transform_0, window_bounds = array<i64: 1, 16, 16, 128>}, {transform_indices = @transform_1, window_bounds = array<i64: 9, 128>}, {transform_indices = @transform_2, window_bounds = array<i64: 1, 16, 16, 128>}]} {
    %cst = arith.constant 0.000000e+00 : f32
    %0 = vector.broadcast %cst : f32 to vector<1x1x18x128xf32>
    %c0 = arith.constant 0 : index
    %c0_0 = arith.constant 0 : index
    %c0_1 = arith.constant 0 : index
    %c0_2 = arith.constant 0 : index
    %1 = vector.load %arg5[%c0, %c0_0, %c0_1, %c0_2] : memref<1x18x18x128xf32, #tpu.memory_space<vmem>>, vector<1x1x18x128xf32>
    tpu.vector_store %arg5[%c0, %c0_0, %c0_1, %c0_2], %0 {strides = array<i32>} : memref<1x18x18x128xf32, #tpu.memory_space<vmem>>, vector<1x1x18x128xf32>,
    %cst_3 = arith.constant 0.000000e+00 : f32
    %2 = vector.broadcast %cst_3 : f32 to vector<1x1x18x128xf32>
    %c0_4 = arith.constant 0 : index
    %c17 = arith.constant 17 : index
    %c0_5 = arith.constant 0 : index
    %c0_6 = arith.constant 0 : index
    %3 = vector.load %arg5[%c0_4, %c17, %c0_5, %c0_6] : memref<1x18x18x128xf32, #tpu.memory_space<vmem>>, vector<1x1x18x128xf32>
    tpu.vector_store %arg5[%c0_4, %c17, %c0_5, %c0_6], %2 {strides = array<i32>} : memref<1x18x18x128xf32, #tpu.memory_space<vmem>>, vector<1x1x18x128xf32>,
    %cst_7 = arith.constant 0.000000e+00 : f32
    %4 = vector.broadcast %cst_7 : f32 to vector<1x16x1x128xf32>
    %c0_8 = arith.constant 0 : index
    %c1 = arith.constant 1 : index
    %c0_9 = arith.constant 0 : index
    %c0_10 = arith.constant 0 : index
    %5 = vector.load %arg5[%c0_8, %c1, %c0_9, %c0_10] : memref<1x18x18x128xf32, #tpu.memory_space<vmem>>, vector<1x16x1x128xf32>
    tpu.vector_store %arg5[%c0_8, %c1, %c0_9, %c0_10], %4 {strides = array<i32>} : memref<1x18x18x128xf32, #tpu.memory_space<vmem>>, vector<1x16x1x128xf32>,
    %cst_11 = arith.constant 0.000000e+00 : f32
    %6 = vector.broadcast %cst_11 : f32 to vector<1x16x1x128xf32>
    %c0_12 = arith.constant 0 : index
    %c1_13 = arith.constant 1 : index
    %c17_14 = arith.constant 17 : index
    %c0_15 = arith.constant 0 : index
    %7 = vector.load %arg5[%c0_12, %c1_13, %c17_14, %c0_15] : memref<1x18x18x128xf32, #tpu.memory_space<vmem>>, vector<1x16x1x128xf32>
    tpu.vector_store %arg5[%c0_12, %c1_13, %c17_14, %c0_15], %6 {strides = array<i32>} : memref<1x18x18x128xf32, #tpu.memory_space<vmem>>, vector<1x16x1x128xf32>,
    %c0_16 = arith.constant 0 : index
    %c0_17 = arith.constant 0 : index
    %c0_18 = arith.constant 0 : index
    %c0_19 = arith.constant 0 : index
    %8 = vector.load %arg2[%c0_16, %c0_17, %c0_18, %c0_19] : memref<1x16x16x128xf32, #tpu.memory_space<vmem>>, vector<1x16x16x128xf32>
    %c0_20 = arith.constant 0 : index
    %c1_21 = arith.constant 1 : index
    %c1_22 = arith.constant 1 : index
    %c0_23 = arith.constant 0 : index
    %9 = vector.load %arg5[%c0_20, %c1_21, %c1_22, %c0_23] : memref<1x18x18x128xf32, #tpu.memory_space<vmem>>, vector<1x16x16x128xf32>
    tpu.vector_store %arg5[%c0_20, %c1_21, %c1_22, %c0_23], %8 {strides = array<i32>} : memref<1x18x18x128xf32, #tpu.memory_space<vmem>>, vector<1x16x16x128xf32>,
    %c0_24 = arith.constant 0 : index
    %c0_25 = arith.constant 0 : index
    %10 = vector.load %arg3[%c0_24, %c0_25] : memref<9x128xf32, #tpu.memory_space<vmem>>, vector<9x128xf32>
    %c0_26 = arith.constant 0 : index
    %c0_27 = arith.constant 0 : index
    %c0_28 = arith.constant 0 : index
    %c0_29 = arith.constant 0 : index
    %11 = vector.load %arg5[%c0_26, %c0_27, %c0_28, %c0_29] : memref<1x18x18x128xf32, #tpu.memory_space<vmem>>, vector<1x18x16x128xf32>
    %12 = vector.extract_strided_slice %11 {offsets = [0, 0, 0, 0], sizes = [1, 16, 16, 128], strides = [1, 1, 1, 1]} : vector<1x18x16x128xf32> to vector<1x16x16x128xf32>
    %13 = vector.extract_strided_slice %10 {offsets = [0, 0], sizes = [1, 128], strides = [1, 1]} : vector<9x128xf32> to vector<1x128xf32>
    %14 = vector.shape_cast %13 : vector<1x128xf32> to vector<128xf32>
    %15 = vector.shape_cast %14 : vector<128xf32> to vector<1x1x1x128xf32>
    %16 = vector.broadcast %15 : vector<1x1x1x128xf32> to vector<1x16x16x128xf32>
    %17 = arith.mulf %12, %16 : vector<1x16x16x128xf32>
    %18 = vector.extract_strided_slice %11 {offsets = [0, 1, 0, 0], sizes = [1, 16, 16, 128], strides = [1, 1, 1, 1]} : vector<1x18x16x128xf32> to vector<1x16x16x128xf32>
    %19 = vector.extract_strided_slice %10 {offsets = [3, 0], sizes = [1, 128], strides = [1, 1]} : vector<9x128xf32> to vector<1x128xf32>
    %20 = vector.shape_cast %19 : vector<1x128xf32> to vector<128xf32>
    %21 = vector.shape_cast %20 : vector<128xf32> to vector<1x1x1x128xf32>
    %22 = vector.broadcast %21 : vector<1x1x1x128xf32> to vector<1x16x16x128xf32>
    %23 = arith.mulf %18, %22 : vector<1x16x16x128xf32>
    %24 = arith.addf %17, %23 : vector<1x16x16x128xf32>
    %25 = vector.extract_strided_slice %11 {offsets = [0, 2, 0, 0], sizes = [1, 16, 16, 128], strides = [1, 1, 1, 1]} : vector<1x18x16x128xf32> to vector<1x16x16x128xf32>
    %26 = vector.extract_strided_slice %10 {offsets = [6, 0], sizes = [1, 128], strides = [1, 1]} : vector<9x128xf32> to vector<1x128xf32>
    %27 = vector.shape_cast %26 : vector<1x128xf32> to vector<128xf32>
    %28 = vector.shape_cast %27 : vector<128xf32> to vector<1x1x1x128xf32>
    %29 = vector.broadcast %28 : vector<1x1x1x128xf32> to vector<1x16x16x128xf32>
    %30 = arith.mulf %25, %29 : vector<1x16x16x128xf32>
    %31 = arith.addf %24, %30 : vector<1x16x16x128xf32>
    %c0_30 = arith.constant 0 : index
    %c0_31 = arith.constant 0 : index
    %c1_32 = arith.constant 1 : index
    %c0_33 = arith.constant 0 : index
    %32 = vector.load %arg5[%c0_30, %c0_31, %c1_32, %c0_33] : memref<1x18x18x128xf32, #tpu.memory_space<vmem>>, vector<1x18x16x128xf32>
    %33 = vector.extract_strided_slice %32 {offsets = [0, 0, 0, 0], sizes = [1, 16, 16, 128], strides = [1, 1, 1, 1]} : vector<1x18x16x128xf32> to vector<1x16x16x128xf32>
    %34 = vector.extract_strided_slice %10 {offsets = [1, 0], sizes = [1, 128], strides = [1, 1]} : vector<9x128xf32> to vector<1x128xf32>
    %35 = vector.shape_cast %34 : vector<1x128xf32> to vector<128xf32>
    %36 = vector.shape_cast %35 : vector<128xf32> to vector<1x1x1x128xf32>
    %37 = vector.broadcast %36 : vector<1x1x1x128xf32> to vector<1x16x16x128xf32>
    %38 = arith.mulf %33, %37 : vector<1x16x16x128xf32>
    %39 = arith.addf %31, %38 : vector<1x16x16x128xf32>
    %40 = vector.extract_strided_slice %32 {offsets = [0, 1, 0, 0], sizes = [1, 16, 16, 128], strides = [1, 1, 1, 1]} : vector<1x18x16x128xf32> to vector<1x16x16x128xf32>
    %41 = vector.extract_strided_slice %10 {offsets = [4, 0], sizes = [1, 128], strides = [1, 1]} : vector<9x128xf32> to vector<1x128xf32>
    %42 = vector.shape_cast %41 : vector<1x128xf32> to vector<128xf32>
    %43 = vector.shape_cast %42 : vector<128xf32> to vector<1x1x1x128xf32>
    %44 = vector.broadcast %43 : vector<1x1x1x128xf32> to vector<1x16x16x128xf32>
    %45 = arith.mulf %40, %44 : vector<1x16x16x128xf32>
    %46 = arith.addf %39, %45 : vector<1x16x16x128xf32>
    %47 = vector.extract_strided_slice %32 {offsets = [0, 2, 0, 0], sizes = [1, 16, 16, 128], strides = [1, 1, 1, 1]} : vector<1x18x16x128xf32> to vector<1x16x16x128xf32>
    %48 = vector.extract_strided_slice %10 {offsets = [7, 0], sizes = [1, 128], strides = [1, 1]} : vector<9x128xf32> to vector<1x128xf32>
    %49 = vector.shape_cast %48 : vector<1x128xf32> to vector<128xf32>
    %50 = vector.shape_cast %49 : vector<128xf32> to vector<1x1x1x128xf32>
    %51 = vector.broadcast %50 : vector<1x1x1x128xf32> to vector<1x16x16x128xf32>
    %52 = arith.mulf %47, %51 : vector<1x16x16x128xf32>
    %53 = arith.addf %46, %52 : vector<1x16x16x128xf32>
    %c0_34 = arith.constant 0 : index
    %c0_35 = arith.constant 0 : index
    %c2 = arith.constant 2 : index
    %c0_36 = arith.constant 0 : index
    %54 = vector.load %arg5[%c0_34, %c0_35, %c2, %c0_36] : memref<1x18x18x128xf32, #tpu.memory_space<vmem>>, vector<1x18x16x128xf32>
    %55 = vector.extract_strided_slice %54 {offsets = [0, 0, 0, 0], sizes = [1, 16, 16, 128], strides = [1, 1, 1, 1]} : vector<1x18x16x128xf32> to vector<1x16x16x128xf32>
    %56 = vector.extract_strided_slice %10 {offsets = [2, 0], sizes = [1, 128], strides = [1, 1]} : vector<9x128xf32> to vector<1x128xf32>
    %57 = vector.shape_cast %56 : vector<1x128xf32> to vector<128xf32>
    %58 = vector.shape_cast %57 : vector<128xf32> to vector<1x1x1x128xf32>
    %59 = vector.broadcast %58 : vector<1x1x1x128xf32> to vector<1x16x16x128xf32>
    %60 = arith.mulf %55, %59 : vector<1x16x16x128xf32>
    %61 = arith.addf %53, %60 : vector<1x16x16x128xf32>
    %62 = vector.extract_strided_slice %54 {offsets = [0, 1, 0, 0], sizes = [1, 16, 16, 128], strides = [1, 1, 1, 1]} : vector<1x18x16x128xf32> to vector<1x16x16x128xf32>
    %63 = vector.extract_strided_slice %10 {offsets = [5, 0], sizes = [1, 128], strides = [1, 1]} : vector<9x128xf32> to vector<1x128xf32>
    %64 = vector.shape_cast %63 : vector<1x128xf32> to vector<128xf32>
    %65 = vector.shape_cast %64 : vector<128xf32> to vector<1x1x1x128xf32>
    %66 = vector.broadcast %65 : vector<1x1x1x128xf32> to vector<1x16x16x128xf32>
    %67 = arith.mulf %62, %66 : vector<1x16x16x128xf32>
    %68 = arith.addf %61, %67 : vector<1x16x16x128xf32>
    %69 = vector.extract_strided_slice %54 {offsets = [0, 2, 0, 0], sizes = [1, 16, 16, 128], strides = [1, 1, 1, 1]} : vector<1x18x16x128xf32> to vector<1x16x16x128xf32>
    %70 = vector.extract_strided_slice %10 {offsets = [8, 0], sizes = [1, 128], strides = [1, 1]} : vector<9x128xf32> to vector<1x128xf32>
    %71 = vector.shape_cast %70 : vector<1x128xf32> to vector<128xf32>
    %72 = vector.shape_cast %71 : vector<128xf32> to vector<1x1x1x128xf32>
    %73 = vector.broadcast %72 : vector<1x1x1x128xf32> to vector<1x16x16x128xf32>
    %74 = arith.mulf %69, %73 : vector<1x16x16x128xf32>
    %75 = arith.addf %68, %74 : vector<1x16x16x128xf32>
    %c0_37 = arith.constant 0 : index
    %c0_38 = arith.constant 0 : index
    %c0_39 = arith.constant 0 : index
    %c0_40 = arith.constant 0 : index
    %76 = vector.load %arg4[%c0_37, %c0_38, %c0_39, %c0_40] : memref<1x16x16x128xf32, #tpu.memory_space<vmem>>, vector<1x16x16x128xf32>
    tpu.vector_store %arg4[%c0_37, %c0_38, %c0_39, %c0_40], %75 {strides = array<i32>} : memref<1x16x16x128xf32, #tpu.memory_space<vmem>>, vector<1x16x16x128xf32>,
    return
  }
  func.func @transform_0(%arg0: i32, %arg1: i32) -> (i32, i32, i32, i32) {
    %c0_i32 = arith.constant 0 : i32
    %c0_i32_0 = arith.constant 0 : i32
    %c0_i32_1 = arith.constant 0 : i32
    return %arg0, %c0_i32, %c0_i32_0, %arg1 : i32, i32, i32, i32
  }
  func.func @transform_1(%arg0: i32, %arg1: i32) -> (i32, i32) {
    %c0_i32 = arith.constant 0 : i32
    %c0_i32_0 = arith.constant 0 : i32
    return %c0_i32, %arg1 : i32, i32
  }
  func.func @transform_2(%arg0: i32, %arg1: i32) -> (i32, i32, i32, i32) {
    %c0_i32 = arith.constant 0 : i32
    %c0_i32_0 = arith.constant 0 : i32
    %c0_i32_1 = arith.constant 0 : i32
    return %arg0, %c0_i32, %c0_i32_0, %arg1 : i32, i32, i32, i32
  }
}

</mosaic_0001>

<llo_original>
// kernel: tpu_custom_call.1
$region0: #{tpu_custom_call.1}
  #allocation0 [shape = 'u32[]', space=smem, size = 0x4, offset = 0x4, fixed_abs, tag = 'smem constant byte address 0x4 - core index']
  #allocation1 [shape = 'u32[144,128]{1,0:T(1,128)}', space=vmem, size = 0x12000, scoped, tag = 'internal scratch']
  #allocation2 [shape = 'f32[1,18,18,128]{3,2,1,0:T(8,128)}', space=vmem, size = 0x36000, scoped, tag = 'scratch operand']
  %s0 = inlined_call_operand.hbm [shape: f32[2,16,16,128], index: 0, kind: input, shape index: {}]
  %s1 = inlined_call_operand.hbm [shape: f32[9,128], index: 1, kind: input, shape index: {}]
  %s2 = inlined_call_operand.hbm [shape: f32[2,16,16,128], index: 2, kind: output, shape index: {}]
  %s3 = sld [smem:[#allocation0]]
  $region49: #{tpu_custom_call.1} parent=0
    _
  %s5 = ssub.s32 1, %s3
  %s6 = scalar_select 0, %s5, %s3
  $region1: #{tpu_custom_call.1} parent=0
    #allocation3 [shape = 'u8[262144]{0}', space=vmem, size = 0x40000, scoped, tag = 'input window, operand 0']
    #allocation4 [shape = 's32[2]{0}', space=sflag, size = 0x8, scoped, tag = 'scoped memory for tpu_custom_call.1']
    #allocation5 [shape = 's32[2]{0}', space=sflag, size = 0x8, scoped, tag = 'scoped memory for tpu_custom_call.1']
    #allocation6 [shape = 'u8[8192]{0}', space=vmem, size = 0x2000, scoped, tag = 'input window, operand 1, single buffered']
    #allocation7 [shape = 's32[1]{0}', space=sflag, size = 0x4, scoped, tag = 'scoped memory for tpu_custom_call.1']
    #allocation8 [shape = 'u8[262144]{0}', space=vmem, size = 0x40000, scoped, tag = 'output window, operand 0']
    %7 = vsyncpa [#allocation4], 0
    %s8 = scalar_lea.sflag [#allocation4], 1
    %9 = vsyncpa %s8, 0
    %10 = vsyncpa [#allocation7], 0
    %11 = vsyncpa [#allocation5], 0
    %s12 = scalar_lea.sflag [#allocation5], 1
    %13 = vsyncpa %s12, 0
    loop: start=0, step=1, limit=4
    $region2: #{tpu_custom_call.1} parent=1 // loop_pre_header
      _
    $region3: #{tpu_custom_call.1} parent=1 // loop_header
      %s15 = sphi 0, %s19
      %p16 = scmp.ge.s32.totalorder %s15, 4
      %s22 = sphi 0, %s34
      %s23 = sphi 0, %s30
      %s24 = sphi 0, %s22
      %s25 = sphi 0, %s23
      %s26 = sphi 0, %s24
      %s27 = sphi 0, %s25
      %s39 = sphi 0, %s41
      %s42 = sphi 0, %s39
      %s43 = sphi 0, %s42
      %s59 = sphi 0, %s43
      %s65 = sphi 0, %s67
      %s68 = sphi 0, %s65
      %s69 = sphi 0, %s68
      %s85 = sphi 0, %s69
      %s93 = sphi 0, %s95
      %s96 = sphi 0, %s93
      %s97 = sphi 0, %s96
      %s113 = sphi 0, %s97
    $region4: #{tpu_custom_call.1} parent=1 // loop_header_branch
      %18 = sbr.rel (%p16) target = $region8
    $region5: #{tpu_custom_call.1} parent=1 // loop_body
      %s20 = ssub.s32 %s15, 1
      %s21 = ssub.s32 %s15, 2
      %s28 = sadd.s32 1, %s23
      %p29 = scmp.ge.s32.totalorder %s28, 1
      %s30 = scalar_select %p29, 0, %s28
      %s31 = sadd.s32 1, %s22
      %s32 = scalar_select %p29, %s31, %s22
      %p33 = scmp.ge.s32.totalorder %s32, 2
      %s34 = scalar_select %p33, 0, %s32
      %s35 = ssub.s32 %s22, %s34
      %s36 = ssub.s32 %s23, %s30
      %s37 = sor.u32 %s35, %s36
      %p38 = scmp.eq.s32.totalorder %s37, 0
      %s40 = sadd.s32 %s39, 1
      %s41 = scalar_select %p38, %s39, %s40
      %p44 = pneg %p38
      %p45 = scmp.eq.s32.totalorder %s15, 1
      %p46 = por %p44, %p45
      %p47 = scmp.ne.s32.totalorder %s39, %s42
      %p48 = scmp.eq.s32.totalorder %s15, 0
      %p49 = por %p47, %p48
      %p50 = scmp.ne.s32.totalorder %s39, %s42
      %p51 = scmp.eq.s32.totalorder %s20, 1
      %p52 = por %p50, %p51
      %p53 = scmp.ne.s32.totalorder %s42, %s43
      %p54 = scmp.eq.s32.totalorder %s20, 0
      %p55 = por %p53, %p54
      %p56 = scmp.ne.s32.totalorder %s42, %s43
      %p57 = scmp.eq.s32.totalorder %s21, 1
      %p58 = por %p56, %p57
      %p60 = scmp.ne.s32.totalorder %s43, %s59
      %p61 = scmp.eq.s32.totalorder %s21, 0
      %p62 = por %p60, %p61
      %s63 = ssub.s32 %s23, %s30
      %p64 = scmp.eq.s32.totalorder %s63, 0
      %s66 = sadd.s32 %s65, 1
      %s67 = scalar_select %p64, %s65, %s66
      %p70 = pneg %p64
      %p71 = scmp.eq.s32.totalorder %s15, 1
      %p72 = por %p70, %p71
      %p73 = scmp.ne.s32.totalorder %s65, %s68
      %p74 = scmp.eq.s32.totalorder %s15, 0
      %p75 = por %p73, %p74
      %p76 = scmp.ne.s32.totalorder %s65, %s68
      %p77 = scmp.eq.s32.totalorder %s20, 1
      %p78 = por %p76, %p77
      %p79 = scmp.ne.s32.totalorder %s68, %s69
      %p80 = scmp.eq.s32.totalorder %s20, 0
      %p81 = por %p79, %p80
      %p82 = scmp.ne.s32.totalorder %s68, %s69
      %p83 = scmp.eq.s32.totalorder %s21, 1
      %p84 = por %p82, %p83
      %p86 = scmp.ne.s32.totalorder %s69, %s85
      %p87 = scmp.eq.s32.totalorder %s21, 0
      %p88 = por %p86, %p87
      %s89 = ssub.s32 %s22, %s34
      %s90 = ssub.s32 %s23, %s30
      %s91 = sor.u32 %s89, %s90
      %p92 = scmp.eq.s32.totalorder %s91, 0
      %s94 = sadd.s32 %s93, 1
      %s95 = scalar_select %p92, %s93, %s94
      %p98 = pneg %p92
      %p99 = scmp.eq.s32.totalorder %s15, 1
      %p100 = por %p98, %p99
      %p101 = scmp.ne.s32.totalorder %s93, %s96
      %p102 = scmp.eq.s32.totalorder %s15, 0
      %p103 = por %p101, %p102
      %p104 = scmp.ne.s32.totalorder %s93, %s96
      %p105 = scmp.eq.s32.totalorder %s20, 1
      %p106 = por %p104, %p105
      %p107 = scmp.ne.s32.totalorder %s96, %s97
      %p108 = scmp.eq.s32.totalorder %s20, 0
      %p109 = por %p107, %p108
      %p110 = scmp.ne.s32.totalorder %s96, %s97
      %p111 = scmp.eq.s32.totalorder %s21, 1
      %p112 = por %p110, %p111
      %p114 = scmp.ne.s32.totalorder %s97, %s113
      %p115 = scmp.eq.s32.totalorder %s21, 0
      %p116 = por %p114, %p115
      %p117 = scmp.le.s32.totalorder 1, %s15
      %p118 = scmp.lt.s32.totalorder %s15, 3
      %p119 = pnand %p117, %p118
      %p120 = pneg %p119
      // Predicated region
      $region9: #{tpu_custom_call.1} parent=5 // pred_check
        _
      $region10: #{tpu_custom_call.1} parent=5 // pred_check_branch
        %122 = sbr.rel (%p119) target = $region12
      $region11: #{tpu_custom_call.1} parent=5 // pred_region
        %s123 = ssub.s32 %s15, 1
        // Predicated region
        $region13: #{tpu_custom_call.1} parent=11 // pred_check
          %p124 = pneg %p81
        $region14: #{tpu_custom_call.1} parent=11 // pred_check_branch
          %126 = sbr.rel (%p124) target = $region16
        $region15: #{tpu_custom_call.1} parent=11 // pred_region
          %s128 = ssub.s32 256, 256
          %129 = vsyncadd [#allocation7], %s128
          %s130 = smul.addr %s25, 128
          %s131 = scalar_lea.hbm %s1, %s130
          %s132 = sshll.u32 [#allocation6], 4
          %s133 = int_to_ptr.vmem [resolvable:$true] %s132
          %138 = dma.hbm_to_vmem [thread:$0]  %s131, 256, %s133, [#allocation7], 128, 128, 8
        $region16: #{tpu_custom_call.1} parent=11 // pred_fallthru
          _
      $region12: #{tpu_custom_call.1} parent=5 // pred_fallthru
        _
      %p139 = scmp.lt.s32.totalorder %s15, 2
      // Predicated region
      $region17: #{tpu_custom_call.1} parent=5 // pred_check
        %p140 = pneg %p139
      $region18: #{tpu_custom_call.1} parent=5 // pred_check_branch
        %142 = sbr.rel (%p140) target = $region20
      $region19: #{tpu_custom_call.1} parent=5 // pred_region
        // Predicated region
        $region21: #{tpu_custom_call.1} parent=19 // pred_check
          %p143 = pneg %p49
        $region22: #{tpu_custom_call.1} parent=19 // pred_check_branch
          %145 = sbr.rel (%p143) target = $region24
        $region23: #{tpu_custom_call.1} parent=19 // pred_region
          %s146 = sand.u32 %s39, 1
          %s147 = scalar_lea.sflag [#allocation4], %s146
          %s148 = sand.u32 %s39, 1
          %s149 = smul.addr %s148, 256
          %s150 = scalar_lea.vmem [#allocation3], %s149
          %s152 = ssub.s32 4096, 4096
          %153 = vsyncadd %s147, %s152
          %s154 = smul.addr %s22, 32
          %s155 = sadd.s32 %s23, %s154
          %s156 = smul.addr %s155, 128
          %s157 = scalar_lea.hbm %s0, %s156
          %s158 = sshll.u32 %s150, 4
          %s159 = int_to_ptr.vmem [resolvable:$true] %s158
          %164 = dma.hbm_to_vmem [thread:$0]  %s157, 4096, %s159, %s147, 128, 128, 8
        $region24: #{tpu_custom_call.1} parent=19 // pred_fallthru
          _
      $region20: #{tpu_custom_call.1} parent=5 // pred_fallthru
        _
      %p165 = scmp.le.s32.totalorder 1, %s15
      %p166 = scmp.lt.s32.totalorder %s15, 3
      %p167 = pnand %p165, %p166
      %p168 = pneg %p167
      // Predicated region
      $region25: #{tpu_custom_call.1} parent=5 // pred_check
        _
      $region26: #{tpu_custom_call.1} parent=5 // pred_check_branch
        %170 = sbr.rel (%p167) target = $region28
      $region27: #{tpu_custom_call.1} parent=5 // pred_region
        %s171 = ssub.s32 %s15, 1
        %s172 = sand.u32 %s42, 1
        %s173 = scalar_lea.sflag [#allocation4], %s172
        %s174 = sand.u32 %s42, 1
        %s175 = smul.addr %s174, 256
        %s176 = scalar_lea.vmem [#allocation3], %s175
        // Predicated region
        $region29: #{tpu_custom_call.1} parent=27 // pred_check
          %p177 = pneg %p55
        $region30: #{tpu_custom_call.1} parent=27 // pred_check_branch
          %179 = sbr.rel (%p177) target = $region32
        $region31: #{tpu_custom_call.1} parent=27 // pred_region
          %180 = dma.done %s173, 4096
        $region32: #{tpu_custom_call.1} parent=27 // pred_fallthru
          _
        // Predicated region
        $region33: #{tpu_custom_call.1} parent=27 // pred_check
          %p181 = pneg %p81
        $region34: #{tpu_custom_call.1} parent=27 // pred_check_branch
          %183 = sbr.rel (%p181) target = $region36
        $region35: #{tpu_custom_call.1} parent=27 // pred_region
          %184 = dma.done [#allocation7], 256
        $region36: #{tpu_custom_call.1} parent=27 // pred_fallthru
          _
        %s185 = sand.u32 %s42, 1
        %s186 = scalar_lea.sflag [#allocation4], %s185
        %s187 = sand.u32 %s42, 1
        %s188 = smul.addr %s187, 256
        %s189 = scalar_lea.vmem [#allocation3], %s188
        %p190 = pneg %p55
        %p191 = pneg %p52
        %p192 = pneg %p81
        %p193 = pneg %p78
        %p194 = pneg %p109
        %p195 = pneg %p106
        %s196 = sand.u32 %s96, 1
        %s197 = scalar_lea.sflag [#allocation5], %s196
        %s198 = sand.u32 %s96, 1
        %s199 = smul.addr %s198, 256
        %s200 = scalar_lea.vmem [#allocation8], %s199
        %201 = vst [vmem:[#allocation2] sm:$0xff] 0.0
        %202 = vst [vmem:[#allocation2 + $0x8] sm:$0xff] 0.0
        %203 = vst [vmem:[#allocation2 + $0x10] sm:$0x3] 0.0
        %s204 = scalar_lea.vmem [#allocation2], 408
        %205 = vst [vmem:[%s204] sm:$0xff] 0.0
        %206 = vst [vmem:[%s204 + $0x8] sm:$0xff] 0.0
        %207 = vst [vmem:[%s204 + $0x10] sm:$0x3] 0.0
        %s208 = scalar_lea.vmem [#allocation2], 24
        %209 = vst [vmem:[%s208] sm:$0x1] 0.0
        %210 = vst [vmem:[%s208 + $0x18] sm:$0x1] 0.0
        %211 = vst [vmem:[%s208 + $0x30] sm:$0x1] 0.0
        %212 = vst [vmem:[%s208 + $0x48] sm:$0x1] 0.0
        %213 = vst [vmem:[%s208 + $0x60] sm:$0x1] 0.0
        %214 = vst [vmem:[%s208 + $0x78] sm:$0x1] 0.0
        %215 = vst [vmem:[%s208 + $0x90] sm:$0x1] 0.0
        %216 = vst [vmem:[%s208 + $0xa8] sm:$0x1] 0.0
        %217 = vst [vmem:[%s208 + $0xc0] sm:$0x1] 0.0
        %218 = vst [vmem:[%s208 + $0xd8] sm:$0x1] 0.0
        %219 = vst [vmem:[%s208 + $0xf0] sm:$0x1] 0.0
        %220 = vst [vmem:[%s208 + $0x108] sm:$0x1] 0.0
        %221 = vst [vmem:[%s208 + $0x120] sm:$0x1] 0.0
        %222 = vst [vmem:[%s208 + $0x138] sm:$0x1] 0.0
        %223 = vst [vmem:[%s208 + $0x150] sm:$0x1] 0.0
        %224 = vst [vmem:[%s208 + $0x168] sm:$0x1] 0.0
        %225 = vst [vmem:[%s208 + $0x11] sm:$0x1] 0.0
        %226 = vst [vmem:[%s208 + $0x29] sm:$0x1] 0.0
        %227 = vst [vmem:[%s208 + $0x41] sm:$0x1] 0.0
        %228 = vst [vmem:[%s208 + $0x59] sm:$0x1] 0.0
        %229 = vst [vmem:[%s208 + $0x71] sm:$0x1] 0.0
        %230 = vst [vmem:[%s208 + $0x89] sm:$0x1] 0.0
        %231 = vst [vmem:[%s208 + $0xa1] sm:$0x1] 0.0
        %232 = vst [vmem:[%s208 + $0xb9] sm:$0x1] 0.0
        %233 = vst [vmem:[%s208 + $0xd1] sm:$0x1] 0.0
        %234 = vst [vmem:[%s208 + $0xe9] sm:$0x1] 0.0
        %235 = vst [vmem:[%s208 + $0x101] sm:$0x1] 0.0
        %236 = vst [vmem:[%s208 + $0x119] sm:$0x1] 0.0
        %237 = vst [vmem:[%s208 + $0x131] sm:$0x1] 0.0
        %238 = vst [vmem:[%s208 + $0x149] sm:$0x1] 0.0
        %239 = vst [vmem:[%s208 + $0x161] sm:$0x1] 0.0
        %240 = vst [vmem:[%s208 + $0x179] sm:$0x1] 0.0
        %v241 = vld [vmem:[%s176] sm:$0xff]
        %v242 = vld [vmem:[%s176 + $0x8] sm:$0xff]
        %v243 = vld [vmem:[%s176 + $0x10] sm:$0xff]
        %v244 = vld [vmem:[%s176 + $0x18] sm:$0xff]
        %v245 = vld [vmem:[%s176 + $0x20] sm:$0xff]
        %v246 = vld [vmem:[%s176 + $0x28] sm:$0xff]
        %v247 = vld [vmem:[%s176 + $0x30] sm:$0xff]
        %v248 = vld [vmem:[%s176 + $0x38] sm:$0xff]
        %v249 = vld [vmem:[%s176 + $0x40] sm:$0xff]
        %v250 = vld [vmem:[%s176 + $0x48] sm:$0xff]
        %v251 = vld [vmem:[%s176 + $0x50] sm:$0xff]
        %v252 = vld [vmem:[%s176 + $0x58] sm:$0xff]
        %v253 = vld [vmem:[%s176 + $0x60] sm:$0xff]
        %v254 = vld [vmem:[%s176 + $0x68] sm:$0xff]
        %v255 = vld [vmem:[%s176 + $0x70] sm:$0xff]
        %v256 = vld [vmem:[%s176 + $0x78] sm:$0xff]
        %v257 = vld [vmem:[%s176 + $0x80] sm:$0xff]
        %v258 = vld [vmem:[%s176 + $0x88] sm:$0xff]
        %v259 = vld [vmem:[%s176 + $0x90] sm:$0xff]
        %v260 = vld [vmem:[%s176 + $0x98] sm:$0xff]
        %v261 = vld [vmem:[%s176 + $0xa0] sm:$0xff]
        %v262 = vld [vmem:[%s176 + $0xa8] sm:$0xff]
        %v263 = vld [vmem:[%s176 + $0xb0] sm:$0xff]
        %v264 = vld [vmem:[%s176 + $0xb8] sm:$0xff]
        %v265 = vld [vmem:[%s176 + $0xc0] sm:$0xff]
        %v266 = vld [vmem:[%s176 + $0xc8] sm:$0xff]
        %v267 = vld [vmem:[%s176 + $0xd0] sm:$0xff]
        %v268 = vld [vmem:[%s176 + $0xd8] sm:$0xff]
        %v269 = vld [vmem:[%s176 + $0xe0] sm:$0xff]
        %v270 = vld [vmem:[%s176 + $0xe8] sm:$0xff]
        %v271 = vld [vmem:[%s176 + $0xf0] sm:$0xff]
        %v272 = vld [vmem:[%s176 + $0xf8] sm:$0xff]
        %273 = vst [vmem:[%s208 + $0x1] sm:$0xff] %v241
        %274 = vst [vmem:[%s208 + $0x9] sm:$0xff] %v242
        %275 = vst [vmem:[%s208 + $0x19] sm:$0xff] %v243
        %276 = vst [vmem:[%s208 + $0x21] sm:$0xff] %v244
        %277 = vst [vmem:[%s208 + $0x31] sm:$0xff] %v245
        %278 = vst [vmem:[%s208 + $0x39] sm:$0xff] %v246
        %279 = vst [vmem:[%s208 + $0x49] sm:$0xff] %v247
        %280 = vst [vmem:[%s208 + $0x51] sm:$0xff] %v248
        %281 = vst [vmem:[%s208 + $0x61] sm:$0xff] %v249
        %282 = vst [vmem:[%s208 + $0x69] sm:$0xff] %v250
        %283 = vst [vmem:[%s208 + $0x79] sm:$0xff] %v251
        %284 = vst [vmem:[%s208 + $0x81] sm:$0xff] %v252
        %285 = vst [vmem:[%s208 + $0x91] sm:$0xff] %v253
        %286 = vst [vmem:[%s208 + $0x99] sm:$0xff] %v254
        %287 = vst [vmem:[%s208 + $0xa9] sm:$0xff] %v255
        %288 = vst [vmem:[%s208 + $0xb1] sm:$0xff] %v256
        %289 = vst [vmem:[%s208 + $0xc1] sm:$0xff] %v257
        %290 = vst [vmem:[%s208 + $0xc9] sm:$0xff] %v258
        %291 = vst [vmem:[%s208 + $0xd9] sm:$0xff] %v259
        %292 = vst [vmem:[%s208 + $0xe1] sm:$0xff] %v260
        %293 = vst [vmem:[%s208 + $0xf1] sm:$0xff] %v261
        %294 = vst [vmem:[%s208 + $0xf9] sm:$0xff] %v262
        %295 = vst [vmem:[%s208 + $0x109] sm:$0xff] %v263
        %296 = vst [vmem:[%s208 + $0x111] sm:$0xff] %v264
        %297 = vst [vmem:[%s208 + $0x121] sm:$0xff] %v265
        %298 = vst [vmem:[%s208 + $0x129] sm:$0xff] %v266
        %299 = vst [vmem:[%s208 + $0x139] sm:$0xff] %v267
        %300 = vst [vmem:[%s208 + $0x141] sm:$0xff] %v268
        %301 = vst [vmem:[%s208 + $0x151] sm:$0xff] %v269
        %302 = vst [vmem:[%s208 + $0x159] sm:$0xff] %v270
        %303 = vst [vmem:[%s208 + $0x169] sm:$0xff] %v271
        %304 = vst [vmem:[%s208 + $0x171] sm:$0xff] %v272
        %v305 = vld [vmem:[#allocation6] sm:$0xff]
        %v306 = vld [vmem:[#allocation6 + $0x8] sm:$0x1]
        %v307 = vld [vmem:[#allocation2] sm:$0xff]
        %v308 = vld [vmem:[#allocation2 + $0x8] sm:$0xff]
        %v309 = vld [vmem:[#allocation2 + $0x18] sm:$0xff]
        %v310 = vld [vmem:[#allocation2 + $0x20] sm:$0xff]
        %v311 = vld [vmem:[#allocation2 + $0x30] sm:$0xff]
        %v312 = vld [vmem:[#allocation2 + $0x38] sm:$0xff]
        %v313 = vld [vmem:[#allocation2 + $0x48] sm:$0xff]
        %v314 = vld [vmem:[#allocation2 + $0x50] sm:$0xff]
        %v315 = vld [vmem:[#allocation2 + $0x60] sm:$0xff]
        %v316 = vld [vmem:[#allocation2 + $0x68] sm:$0xff]
        %v317 = vld [vmem:[#allocation2 + $0x78] sm:$0xff]
        %v318 = vld [vmem:[#allocation2 + $0x80] sm:$0xff]
        %v319 = vld [vmem:[#allocation2 + $0x90] sm:$0xff]
        %v320 = vld [vmem:[#allocation2 + $0x98] sm:$0xff]
        %v321 = vld [vmem:[#allocation2 + $0xa8] sm:$0xff]
        %v322 = vld [vmem:[#allocation2 + $0xb0] sm:$0xff]
        %v323 = vld [vmem:[#allocation2 + $0xc0] sm:$0xff]
        %v324 = vld [vmem:[#allocation2 + $0xc8] sm:$0xff]
        %v325 = vld [vmem:[#allocation2 + $0xd8] sm:$0xff]
        %v326 = vld [vmem:[#allocation2 + $0xe0] sm:$0xff]
        %v327 = vld [vmem:[#allocation2 + $0xf0] sm:$0xff]
        %v328 = vld [vmem:[#allocation2 + $0xf8] sm:$0xff]
        %v329 = vld [vmem:[#allocation2 + $0x108] sm:$0xff]
        %v330 = vld [vmem:[#allocation2 + $0x110] sm:$0xff]
        %v331 = vld [vmem:[#allocation2 + $0x120] sm:$0xff]
        %v332 = vld [vmem:[#allocation2 + $0x128] sm:$0xff]
        %v333 = vld [vmem:[#allocation2 + $0x138] sm:$0xff]
        %v334 = vld [vmem:[#allocation2 + $0x140] sm:$0xff]
        %v335 = vld [vmem:[#allocation2 + $0x150] sm:$0xff]
        %v336 = vld [vmem:[#allocation2 + $0x158] sm:$0xff]
        %v337 = vld [vmem:[#allocation2 + $0x168] sm:$0xff]
        %v338 = vld [vmem:[#allocation2 + $0x170] sm:$0xff]
        %v339 = vld [vmem:[#allocation2 + $0x180] sm:$0xff]
        %v340 = vld [vmem:[#allocation2 + $0x188] sm:$0xff]
        %v341 = vld [vmem:[#allocation2 + $0x198] sm:$0xff]
        %v342 = vld [vmem:[#allocation2 + $0x1a0] sm:$0xff]
        %v343 = vlaneseq
        %v344 = vshrl.u32 %v343, 7
        %v345 = vsub.s32 0, %v344
        %v346 = vrot.slane %v305, %v345
        %v347 = vmul.f32 %v307, %v346
        %v348 = vmul.f32 %v308, %v346
        %v349 = vmul.f32 %v309, %v346
        %v350 = vmul.f32 %v310, %v346
        %v351 = vmul.f32 %v311, %v346
        %v352 = vmul.f32 %v312, %v346
        %v353 = vmul.f32 %v313, %v346
        %v354 = vmul.f32 %v314, %v346
        %v355 = vmul.f32 %v315, %v346
        %v356 = vmul.f32 %v316, %v346
        %v357 = vmul.f32 %v317, %v346
        %v358 = vmul.f32 %v318, %v346
        %v359 = vmul.f32 %v319, %v346
        %v360 = vmul.f32 %v320, %v346
        %v361 = vmul.f32 %v321, %v346
        %v362 = vmul.f32 %v322, %v346
        %v363 = vmul.f32 %v323, %v346
        %v364 = vmul.f32 %v324, %v346
        %v365 = vmul.f32 %v325, %v346
        %v366 = vmul.f32 %v326, %v346
        %v367 = vmul.f32 %v327, %v346
        %v368 = vmul.f32 %v328, %v346
        %v369 = vmul.f32 %v329, %v346
        %v370 = vmul.f32 %v330, %v346
        %v371 = vmul.f32 %v331, %v346
        %v372 = vmul.f32 %v332, %v346
        %v373 = vmul.f32 %v333, %v346
        %v374 = vmul.f32 %v334, %v346
        %v375 = vmul.f32 %v335, %v346
        %v376 = vmul.f32 %v336, %v346
        %v377 = vmul.f32 %v337, %v346
        %v378 = vmul.f32 %v338, %v346
        %v379 = vlaneseq
        %v380 = vshrl.u32 %v379, 7
        %v381 = vsub.s32 3, %v380
        %v382 = vrot.slane %v305, %v381
        %v383 = vmul.f32 %v309, %v382
        %v384 = vmul.f32 %v310, %v382
        %v385 = vmul.f32 %v311, %v382
        %v386 = vmul.f32 %v312, %v382
        %v387 = vmul.f32 %v313, %v382
        %v388 = vmul.f32 %v314, %v382
        %v389 = vmul.f32 %v315, %v382
        %v390 = vmul.f32 %v316, %v382
        %v391 = vmul.f32 %v317, %v382
        %v392 = vmul.f32 %v318, %v382
        %v393 = vmul.f32 %v319, %v382
        %v394 = vmul.f32 %v320, %v382
        %v395 = vmul.f32 %v321, %v382
        %v396 = vmul.f32 %v322, %v382
        %v397 = vmul.f32 %v323, %v382
        %v398 = vmul.f32 %v324, %v382
        %v399 = vmul.f32 %v325, %v382
        %v400 = vmul.f32 %v326, %v382
        %v401 = vmul.f32 %v327, %v382
        %v402 = vmul.f32 %v328, %v382
        %v403 = vmul.f32 %v329, %v382
        %v404 = vmul.f32 %v330, %v382
        %v405 = vmul.f32 %v331, %v382
        %v406 = vmul.f32 %v332, %v382
        %v407 = vmul.f32 %v333, %v382
        %v408 = vmul.f32 %v334, %v382
        %v409 = vmul.f32 %v335, %v382
        %v410 = vmul.f32 %v336, %v382
        %v411 = vmul.f32 %v337, %v382
        %v412 = vmul.f32 %v338, %v382
        %v413 = vmul.f32 %v339, %v382
        %v414 = vmul.f32 %v340, %v382
        %v415 = vadd.f32 %v347, %v383
        %v416 = vadd.f32 %v348, %v384
        %v417 = vadd.f32 %v349, %v385
        %v418 = vadd.f32 %v350, %v386
        %v419 = vadd.f32 %v351, %v387
        %v420 = vadd.f32 %v352, %v388
        %v421 = vadd.f32 %v353, %v389
        %v422 = vadd.f32 %v354, %v390
        %v423 = vadd.f32 %v355, %v391
        %v424 = vadd.f32 %v356, %v392
        %v425 = vadd.f32 %v357, %v393
        %v426 = vadd.f32 %v358, %v394
        %v427 = vadd.f32 %v359, %v395
        %v428 = vadd.f32 %v360, %v396
        %v429 = vadd.f32 %v361, %v397
        %v430 = vadd.f32 %v362, %v398
        %v431 = vadd.f32 %v363, %v399
        %v432 = vadd.f32 %v364, %v400
        %v433 = vadd.f32 %v365, %v401
        %v434 = vadd.f32 %v366, %v402
        %v435 = vadd.f32 %v367, %v403
        %v436 = vadd.f32 %v368, %v404
        %v437 = vadd.f32 %v369, %v405
        %v438 = vadd.f32 %v370, %v406
        %v439 = vadd.f32 %v371, %v407
        %v440 = vadd.f32 %v372, %v408
        %v441 = vadd.f32 %v373, %v409
        %v442 = vadd.f32 %v374, %v410
        %v443 = vadd.f32 %v375, %v411
        %v444 = vadd.f32 %v376, %v412
        %v445 = vadd.f32 %v377, %v413
        %v446 = vadd.f32 %v378, %v414
        %v447 = vlaneseq
        %v448 = vshrl.u32 %v447, 7
        %v449 = vsub.s32 6, %v448
        %v450 = vrot.slane %v305, %v449
        %v451 = vmul.f32 %v311, %v450
        %v452 = vmul.f32 %v312, %v450
        %v453 = vmul.f32 %v313, %v450
        %v454 = vmul.f32 %v314, %v450
        %v455 = vmul.f32 %v315, %v450
        %v456 = vmul.f32 %v316, %v450
        %v457 = vmul.f32 %v317, %v450
        %v458 = vmul.f32 %v318, %v450
        %v459 = vmul.f32 %v319, %v450
        %v460 = vmul.f32 %v320, %v450
        %v461 = vmul.f32 %v321, %v450
        %v462 = vmul.f32 %v322, %v450
        %v463 = vmul.f32 %v323, %v450
        %v464 = vmul.f32 %v324, %v450
        %v465 = vmul.f32 %v325, %v450
        %v466 = vmul.f32 %v326, %v450
        %v467 = vmul.f32 %v327, %v450
        %v468 = vmul.f32 %v328, %v450
        %v469 = vmul.f32 %v329, %v450
        %v470 = vmul.f32 %v330, %v450
        %v471 = vmul.f32 %v331, %v450
        %v472 = vmul.f32 %v332, %v450
        %v473 = vmul.f32 %v333, %v450
        %v474 = vmul.f32 %v334, %v450
        %v475 = vmul.f32 %v335, %v450
        %v476 = vmul.f32 %v336, %v450
        %v477 = vmul.f32 %v337, %v450
        %v478 = vmul.f32 %v338, %v450
        %v479 = vmul.f32 %v339, %v450
        %v480 = vmul.f32 %v340, %v450
        %v481 = vmul.f32 %v341, %v450
        %v482 = vmul.f32 %v342, %v450
        %v483 = vadd.f32 %v415, %v451
        %v484 = vadd.f32 %v416, %v452
        %v485 = vadd.f32 %v417, %v453
        %v486 = vadd.f32 %v418, %v454
        %v487 = vadd.f32 %v419, %v455
        %v488 = vadd.f32 %v420, %v456
        %v489 = vadd.f32 %v421, %v457
        %v490 = vadd.f32 %v422, %v458
        %v491 = vadd.f32 %v423, %v459
        %v492 = vadd.f32 %v424, %v460
        %v493 = vadd.f32 %v425, %v461
        %v494 = vadd.f32 %v426, %v462
        %v495 = vadd.f32 %v427, %v463
        %v496 = vadd.f32 %v428, %v464
        %v497 = vadd.f32 %v429, %v465
        %v498 = vadd.f32 %v430, %v466
        %v499 = vadd.f32 %v431, %v467
        %v500 = vadd.f32 %v432, %v468
        %v501 = vadd.f32 %v433, %v469
        %v502 = vadd.f32 %v434, %v470
        %v503 = vadd.f32 %v435, %v471
        %v504 = vadd.f32 %v436, %v472
        %v505 = vadd.f32 %v437, %v473
        %v506 = vadd.f32 %v438, %v474
        %v507 = vadd.f32 %v439, %v475
        %v508 = vadd.f32 %v440, %v476
        %v509 = vadd.f32 %v441, %v477
        %v510 = vadd.f32 %v442, %v478
        %v511 = vadd.f32 %v443, %v479
        %v512 = vadd.f32 %v444, %v480
        %v513 = vadd.f32 %v445, %v481
        %v514 = vadd.f32 %v446, %v482
        %v515 = vld [vmem:[#allocation2 + $0x1] sm:$0xff]
        %v516 = vld [vmem:[#allocation2 + $0x9] sm:$0xff]
        %v517 = vld [vmem:[#allocation2 + $0x19] sm:$0xff]
        %v518 = vld [vmem:[#allocation2 + $0x21] sm:$0xff]
        %v519 = vld [vmem:[#allocation2 + $0x31] sm:$0xff]
        %v520 = vld [vmem:[#allocation2 + $0x39] sm:$0xff]
        %v521 = vld [vmem:[#allocation2 + $0x49] sm:$0xff]
        %v522 = vld [vmem:[#allocation2 + $0x51] sm:$0xff]
        %v523 = vld [vmem:[#allocation2 + $0x61] sm:$0xff]
        %v524 = vld [vmem:[#allocation2 + $0x69] sm:$0xff]
        %v525 = vld [vmem:[#allocation2 + $0x79] sm:$0xff]
        %v526 = vld [vmem:[#allocation2 + $0x81] sm:$0xff]
        %v527 = vld [vmem:[#allocation2 + $0x91] sm:$0xff]
        %v528 = vld [vmem:[#allocation2 + $0x99] sm:$0xff]
        %v529 = vld [vmem:[#allocation2 + $0xa9] sm:$0xff]
        %v530 = vld [vmem:[#allocation2 + $0xb1] sm:$0xff]
        %v531 = vld [vmem:[#allocation2 + $0xc1] sm:$0xff]
        %v532 = vld [vmem:[#allocation2 + $0xc9] sm:$0xff]
        %v533 = vld [vmem:[#allocation2 + $0xd9] sm:$0xff]
        %v534 = vld [vmem:[#allocation2 + $0xe1] sm:$0xff]
        %v535 = vld [vmem:[#allocation2 + $0xf1] sm:$0xff]
        %v536 = vld [vmem:[#allocation2 + $0xf9] sm:$0xff]
        %v537 = vld [vmem:[#allocation2 + $0x109] sm:$0xff]
        %v538 = vld [vmem:[#allocation2 + $0x111] sm:$0xff]
        %v539 = vld [vmem:[#allocation2 + $0x121] sm:$0xff]
        %v540 = vld [vmem:[#allocation2 + $0x129] sm:$0xff]
        %v541 = vld [vmem:[#allocation2 + $0x139] sm:$0xff]
        %v542 = vld [vmem:[#allocation2 + $0x141] sm:$0xff]
        %v543 = vld [vmem:[#allocation2 + $0x151] sm:$0xff]
        %v544 = vld [vmem:[#allocation2 + $0x159] sm:$0xff]
        %v545 = vld [vmem:[#allocation2 + $0x169] sm:$0xff]
        %v546 = vld [vmem:[#allocation2 + $0x171] sm:$0xff]
        %v547 = vld [vmem:[#allocation2 + $0x181] sm:$0xff]
        %v548 = vld [vmem:[#allocation2 + $0x189] sm:$0xff]
        %v549 = vld [vmem:[#allocation2 + $0x199] sm:$0xff]
        %v550 = vld [vmem:[#allocation2 + $0x1a1] sm:$0xff]
        %v551 = vlaneseq
        %v552 = vshrl.u32 %v551, 7
        %v553 = vsub.s32 1, %v552
        %v554 = vrot.slane %v305, %v553
        %v555 = vmul.f32 %v515, %v554
        %v556 = vmul.f32 %v516, %v554
        %v557 = vmul.f32 %v517, %v554
        %v558 = vmul.f32 %v518, %v554
        %v559 = vmul.f32 %v519, %v554
        %v560 = vmul.f32 %v520, %v554
        %v561 = vmul.f32 %v521, %v554
        %v562 = vmul.f32 %v522, %v554
        %v563 = vmul.f32 %v523, %v554
        %v564 = vmul.f32 %v524, %v554
        %v565 = vmul.f32 %v525, %v554
        %v566 = vmul.f32 %v526, %v554
        %v567 = vmul.f32 %v527, %v554
        %v568 = vmul.f32 %v528, %v554
        %v569 = vmul.f32 %v529, %v554
        %v570 = vmul.f32 %v530, %v554
        %v571 = vmul.f32 %v531, %v554
        %v572 = vmul.f32 %v532, %v554
        %v573 = vmul.f32 %v533, %v554
        %v574 = vmul.f32 %v534, %v554
        %v575 = vmul.f32 %v535, %v554
        %v576 = vmul.f32 %v536, %v554
        %v577 = vmul.f32 %v537, %v554
        %v578 = vmul.f32 %v538, %v554
        %v579 = vmul.f32 %v539, %v554
        %v580 = vmul.f32 %v540, %v554
        %v581 = vmul.f32 %v541, %v554
        %v582 = vmul.f32 %v542, %v554
        %v583 = vmul.f32 %v543, %v554
        %v584 = vmul.f32 %v544, %v554
        %v585 = vmul.f32 %v545, %v554
        %v586 = vmul.f32 %v546, %v554
        %v587 = vadd.f32 %v483, %v555
        %v588 = vadd.f32 %v484, %v556
        %v589 = vadd.f32 %v485, %v557
        %v590 = vadd.f32 %v486, %v558
        %v591 = vadd.f32 %v487, %v559
        %v592 = vadd.f32 %v488, %v560
        %v593 = vadd.f32 %v489, %v561
        %v594 = vadd.f32 %v490, %v562
        %v595 = vadd.f32 %v491, %v563
        %v596 = vadd.f32 %v492, %v564
        %v597 = vadd.f32 %v493, %v565
        %v598 = vadd.f32 %v494, %v566
        %v599 = vadd.f32 %v495, %v567
        %v600 = vadd.f32 %v496, %v568
        %v601 = vadd.f32 %v497, %v569
        %v602 = vadd.f32 %v498, %v570
        %v603 = vadd.f32 %v499, %v571
        %v604 = vadd.f32 %v500, %v572
        %v605 = vadd.f32 %v501, %v573
        %v606 = vadd.f32 %v502, %v574
        %v607 = vadd.f32 %v503, %v575
        %v608 = vadd.f32 %v504, %v576
        %v609 = vadd.f32 %v505, %v577
        %v610 = vadd.f32 %v506, %v578
        %v611 = vadd.f32 %v507, %v579
        %v612 = vadd.f32 %v508, %v580
        %v613 = vadd.f32 %v509, %v581
        %v614 = vadd.f32 %v510, %v582
        %v615 = vadd.f32 %v511, %v583
        %v616 = vadd.f32 %v512, %v584
        %v617 = vadd.f32 %v513, %v585
        %v618 = vadd.f32 %v514, %v586
        %v619 = vlaneseq
        %v620 = vshrl.u32 %v619, 7
        %v621 = vsub.s32 4, %v620
        %v622 = vrot.slane %v305, %v621
        %v623 = vmul.f32 %v517, %v622
        %v624 = vmul.f32 %v518, %v622
        %v625 = vmul.f32 %v519, %v622
        %v626 = vmul.f32 %v520, %v622
        %v627 = vmul.f32 %v521, %v622
        %v628 = vmul.f32 %v522, %v622
        %v629 = vmul.f32 %v523, %v622
        %v630 = vmul.f32 %v524, %v622
        %v631 = vmul.f32 %v525, %v622
        %v632 = vmul.f32 %v526, %v622
        %v633 = vmul.f32 %v527, %v622
        %v634 = vmul.f32 %v528, %v622
        %v635 = vmul.f32 %v529, %v622
        %v636 = vmul.f32 %v530, %v622
        %v637 = vmul.f32 %v531, %v622
        %v638 = vmul.f32 %v532, %v622
        %v639 = vmul.f32 %v533, %v622
        %v640 = vmul.f32 %v534, %v622
        %v641 = vmul.f32 %v535, %v622
        %v642 = vmul.f32 %v536, %v622
        %v643 = vmul.f32 %v537, %v622
        %v644 = vmul.f32 %v538, %v622
        %v645 = vmul.f32 %v539, %v622
        %v646 = vmul.f32 %v540, %v622
        %v647 = vmul.f32 %v541, %v622
        %v648 = vmul.f32 %v542, %v622
        %v649 = vmul.f32 %v543, %v622
        %v650 = vmul.f32 %v544, %v622
        %v651 = vmul.f32 %v545, %v622
        %v652 = vmul.f32 %v546, %v622
        %v653 = vmul.f32 %v547, %v622
        %v654 = vmul.f32 %v548, %v622
        %v655 = vadd.f32 %v587, %v623
        %v656 = vadd.f32 %v588, %v624
        %v657 = vadd.f32 %v589, %v625
        %v658 = vadd.f32 %v590, %v626
        %v659 = vadd.f32 %v591, %v627
        %v660 = vadd.f32 %v592, %v628
        %v661 = vadd.f32 %v593, %v629
        %v662 = vadd.f32 %v594, %v630
        %v663 = vadd.f32 %v595, %v631
        %v664 = vadd.f32 %v596, %v632
        %v665 = vadd.f32 %v597, %v633
        %v666 = vadd.f32 %v598, %v634
        %v667 = vadd.f32 %v599, %v635
        %v668 = vadd.f32 %v600, %v636
        %v669 = vadd.f32 %v601, %v637
        %v670 = vadd.f32 %v602, %v638
        %v671 = vadd.f32 %v603, %v639
        %v672 = vadd.f32 %v604, %v640
        %v673 = vadd.f32 %v605, %v641
        %v674 = vadd.f32 %v606, %v642
        %v675 = vadd.f32 %v607, %v643
        %v676 = vadd.f32 %v608, %v644
        %v677 = vadd.f32 %v609, %v645
        %v678 = vadd.f32 %v610, %v646
        %v679 = vadd.f32 %v611, %v647
        %v680 = vadd.f32 %v612, %v648
        %v681 = vadd.f32 %v613, %v649
        %v682 = vadd.f32 %v614, %v650
        %v683 = vadd.f32 %v615, %v651
        %v684 = vadd.f32 %v616, %v652
        %v685 = vadd.f32 %v617, %v653
        %v686 = vadd.f32 %v618, %v654
        %v687 = vlaneseq
        %v688 = vshrl.u32 %v687, 7
        %v689 = vsub.s32 7, %v688
        %v690 = vrot.slane %v305, %v689
        %v691 = vmul.f32 %v519, %v690
        %v692 = vmul.f32 %v520, %v690
        %v693 = vmul.f32 %v521, %v690
        %v694 = vmul.f32 %v522, %v690
        %v695 = vmul.f32 %v523, %v690
        %v696 = vmul.f32 %v524, %v690
        %v697 = vmul.f32 %v525, %v690
        %v698 = vmul.f32 %v526, %v690
        %v699 = vmul.f32 %v527, %v690
        %v700 = vmul.f32 %v528, %v690
        %v701 = vmul.f32 %v529, %v690
        %v702 = vmul.f32 %v530, %v690
        %v703 = vmul.f32 %v531, %v690
        %v704 = vmul.f32 %v532, %v690
        %v705 = vmul.f32 %v533, %v690
        %v706 = vmul.f32 %v534, %v690
        %v707 = vmul.f32 %v535, %v690
        %v708 = vmul.f32 %v536, %v690
        %v709 = vmul.f32 %v537, %v690
        %v710 = vmul.f32 %v538, %v690
        %v711 = vmul.f32 %v539, %v690
        %v712 = vmul.f32 %v540, %v690
        %v713 = vmul.f32 %v541, %v690
        %v714 = vmul.f32 %v542, %v690
        %v715 = vmul.f32 %v543, %v690
        %v716 = vmul.f32 %v544, %v690
        %v717 = vmul.f32 %v545, %v690
        %v718 = vmul.f32 %v546, %v690
        %v719 = vmul.f32 %v547, %v690
        %v720 = vmul.f32 %v548, %v690
        %v721 = vmul.f32 %v549, %v690
        %v722 = vmul.f32 %v550, %v690
        %v723 = vadd.f32 %v655, %v691
        %v724 = vadd.f32 %v656, %v692
        %v725 = vadd.f32 %v657, %v693
        %v726 = vadd.f32 %v658, %v694
        %v727 = vadd.f32 %v659, %v695
        %v728 = vadd.f32 %v660, %v696
        %v729 = vadd.f32 %v661, %v697
        %v730 = vadd.f32 %v662, %v698
        %v731 = vadd.f32 %v663, %v699
        %v732 = vadd.f32 %v664, %v700
        %v733 = vadd.f32 %v665, %v701
        %v734 = vadd.f32 %v666, %v702
        %v735 = vadd.f32 %v667, %v703
        %v736 = vadd.f32 %v668, %v704
        %v737 = vadd.f32 %v669, %v705
        %v738 = vadd.f32 %v670, %v706
        %v739 = vadd.f32 %v671, %v707
        %v740 = vadd.f32 %v672, %v708
        %v741 = vadd.f32 %v673, %v709
        %v742 = vadd.f32 %v674, %v710
        %v743 = vadd.f32 %v675, %v711
        %v744 = vadd.f32 %v676, %v712
        %v745 = vadd.f32 %v677, %v713
        %v746 = vadd.f32 %v678, %v714
        %v747 = vadd.f32 %v679, %v715
        %v748 = vadd.f32 %v680, %v716
        %v749 = vadd.f32 %v681, %v717
        %v750 = vadd.f32 %v682, %v718
        %v751 = vadd.f32 %v683, %v719
        %v752 = vadd.f32 %v684, %v720
        %v753 = vadd.f32 %v685, %v721
        %v754 = vadd.f32 %v686, %v722
        %v755 = vld [vmem:[#allocation2 + $0x2] sm:$0xff]
        %v756 = vld [vmem:[#allocation2 + $0xa] sm:$0xff]
        %v757 = vld [vmem:[#allocation2 + $0x1a] sm:$0xff]
        %v758 = vld [vmem:[#allocation2 + $0x22] sm:$0xff]
        %v759 = vld [vmem:[#allocation2 + $0x32] sm:$0xff]
        %v760 = vld [vmem:[#allocation2 + $0x3a] sm:$0xff]
        %v761 = vld [vmem:[#allocation2 + $0x4a] sm:$0xff]
        %v762 = vld [vmem:[#allocation2 + $0x52] sm:$0xff]
        %v763 = vld [vmem:[#allocation2 + $0x62] sm:$0xff]
        %v764 = vld [vmem:[#allocation2 + $0x6a] sm:$0xff]
        %v765 = vld [vmem:[#allocation2 + $0x7a] sm:$0xff]
        %v766 = vld [vmem:[#allocation2 + $0x82] sm:$0xff]
        %v767 = vld [vmem:[#allocation2 + $0x92] sm:$0xff]
        %v768 = vld [vmem:[#allocation2 + $0x9a] sm:$0xff]
        %v769 = vld [vmem:[#allocation2 + $0xaa] sm:$0xff]
        %v770 = vld [vmem:[#allocation2 + $0xb2] sm:$0xff]
        %v771 = vld [vmem:[#allocation2 + $0xc2] sm:$0xff]
        %v772 = vld [vmem:[#allocation2 + $0xca] sm:$0xff]
        %v773 = vld [vmem:[#allocation2 + $0xda] sm:$0xff]
        %v774 = vld [vmem:[#allocation2 + $0xe2] sm:$0xff]
        %v775 = vld [vmem:[#allocation2 + $0xf2] sm:$0xff]
        %v776 = vld [vmem:[#allocation2 + $0xfa] sm:$0xff]
        %v777 = vld [vmem:[#allocation2 + $0x10a] sm:$0xff]
        %v778 = vld [vmem:[#allocation2 + $0x112] sm:$0xff]
        %v779 = vld [vmem:[#allocation2 + $0x122] sm:$0xff]
        %v780 = vld [vmem:[#allocation2 + $0x12a] sm:$0xff]
        %v781 = vld [vmem:[#allocation2 + $0x13a] sm:$0xff]
        %v782 = vld [vmem:[#allocation2 + $0x142] sm:$0xff]
        %v783 = vld [vmem:[#allocation2 + $0x152] sm:$0xff]
        %v784 = vld [vmem:[#allocation2 + $0x15a] sm:$0xff]
        %v785 = vld [vmem:[#allocation2 + $0x16a] sm:$0xff]
        %v786 = vld [vmem:[#allocation2 + $0x172] sm:$0xff]
        %v787 = vld [vmem:[#allocation2 + $0x182] sm:$0xff]
        %v788 = vld [vmem:[#allocation2 + $0x18a] sm:$0xff]
        %v789 = vld [vmem:[#allocation2 + $0x19a] sm:$0xff]
        %v790 = vld [vmem:[#allocation2 + $0x1a2] sm:$0xff]
        %v791 = vlaneseq
        %v792 = vshrl.u32 %v791, 7
        %v793 = vsub.s32 2, %v792
        %v794 = vrot.slane %v305, %v793
        %v795 = vmul.f32 %v755, %v794
        %v796 = vmul.f32 %v756, %v794
        %v797 = vmul.f32 %v757, %v794
        %v798 = vmul.f32 %v758, %v794
        %v799 = vmul.f32 %v759, %v794
        %v800 = vmul.f32 %v760, %v794
        %v801 = vmul.f32 %v761, %v794
        %v802 = vmul.f32 %v762, %v794
        %v803 = vmul.f32 %v763, %v794
        %v804 = vmul.f32 %v764, %v794
        %v805 = vmul.f32 %v765, %v794
        %v806 = vmul.f32 %v766, %v794
        %v807 = vmul.f32 %v767, %v794
        %v808 = vmul.f32 %v768, %v794
        %v809 = vmul.f32 %v769, %v794
        %v810 = vmul.f32 %v770, %v794
        %v811 = vmul.f32 %v771, %v794
        %v812 = vmul.f32 %v772, %v794
        %v813 = vmul.f32 %v773, %v794
        %v814 = vmul.f32 %v774, %v794
        %v815 = vmul.f32 %v775, %v794
        %v816 = vmul.f32 %v776, %v794
        %v817 = vmul.f32 %v777, %v794
        %v818 = vmul.f32 %v778, %v794
        %v819 = vmul.f32 %v779, %v794
        %v820 = vmul.f32 %v780, %v794
        %v821 = vmul.f32 %v781, %v794
        %v822 = vmul.f32 %v782, %v794
        %v823 = vmul.f32 %v783, %v794
        %v824 = vmul.f32 %v784, %v794
        %v825 = vmul.f32 %v785, %v794
        %v826 = vmul.f32 %v786, %v794
        %v827 = vadd.f32 %v723, %v795
        %v828 = vadd.f32 %v724, %v796
        %v829 = vadd.f32 %v725, %v797
        %v830 = vadd.f32 %v726, %v798
        %v831 = vadd.f32 %v727, %v799
        %v832 = vadd.f32 %v728, %v800
        %v833 = vadd.f32 %v729, %v801
        %v834 = vadd.f32 %v730, %v802
        %v835 = vadd.f32 %v731, %v803
        %v836 = vadd.f32 %v732, %v804
        %v837 = vadd.f32 %v733, %v805
        %v838 = vadd.f32 %v734, %v806
        %v839 = vadd.f32 %v735, %v807
        %v840 = vadd.f32 %v736, %v808
        %v841 = vadd.f32 %v737, %v809
        %v842 = vadd.f32 %v738, %v810
        %v843 = vadd.f32 %v739, %v811
        %v844 = vadd.f32 %v740, %v812
        %v845 = vadd.f32 %v741, %v813
        %v846 = vadd.f32 %v742, %v814
        %v847 = vadd.f32 %v743, %v815
        %v848 = vadd.f32 %v744, %v816
        %v849 = vadd.f32 %v745, %v817
        %v850 = vadd.f32 %v746, %v818
        %v851 = vadd.f32 %v747, %v819
        %v852 = vadd.f32 %v748, %v820
        %v853 = vadd.f32 %v749, %v821
        %v854 = vadd.f32 %v750, %v822
        %v855 = vadd.f32 %v751, %v823
        %v856 = vadd.f32 %v752, %v824
        %v857 = vadd.f32 %v753, %v825
        %v858 = vadd.f32 %v754, %v826
        %v859 = vlaneseq
        %v860 = vshrl.u32 %v859, 7
        %v861 = vsub.s32 5, %v860
        %v862 = vrot.slane %v305, %v861
        %v863 = vmul.f32 %v757, %v862
        %v864 = vmul.f32 %v758, %v862
        %v865 = vmul.f32 %v759, %v862
        %v866 = vmul.f32 %v760, %v862
        %v867 = vmul.f32 %v761, %v862
        %v868 = vmul.f32 %v762, %v862
        %v869 = vmul.f32 %v763, %v862
        %v870 = vmul.f32 %v764, %v862
        %v871 = vmul.f32 %v765, %v862
        %v872 = vmul.f32 %v766, %v862
        %v873 = vmul.f32 %v767, %v862
        %v874 = vmul.f32 %v768, %v862
        %v875 = vmul.f32 %v769, %v862
        %v876 = vmul.f32 %v770, %v862
        %v877 = vmul.f32 %v771, %v862
        %v878 = vmul.f32 %v772, %v862
        %v879 = vmul.f32 %v773, %v862
        %v880 = vmul.f32 %v774, %v862
        %v881 = vmul.f32 %v775, %v862
        %v882 = vmul.f32 %v776, %v862
        %v883 = vmul.f32 %v777, %v862
        %v884 = vmul.f32 %v778, %v862
        %v885 = vmul.f32 %v779, %v862
        %v886 = vmul.f32 %v780, %v862
        %v887 = vmul.f32 %v781, %v862
        %v888 = vmul.f32 %v782, %v862
        %v889 = vmul.f32 %v783, %v862
        %v890 = vmul.f32 %v784, %v862
        %v891 = vmul.f32 %v785, %v862
        %v892 = vmul.f32 %v786, %v862
        %v893 = vmul.f32 %v787, %v862
        %v894 = vmul.f32 %v788, %v862
        %v895 = vadd.f32 %v827, %v863
        %v896 = vadd.f32 %v828, %v864
        %v897 = vadd.f32 %v829, %v865
        %v898 = vadd.f32 %v830, %v866
        %v899 = vadd.f32 %v831, %v867
        %v900 = vadd.f32 %v832, %v868
        %v901 = vadd.f32 %v833, %v869
        %v902 = vadd.f32 %v834, %v870
        %v903 = vadd.f32 %v835, %v871
        %v904 = vadd.f32 %v836, %v872
        %v905 = vadd.f32 %v837, %v873
        %v906 = vadd.f32 %v838, %v874
        %v907 = vadd.f32 %v839, %v875
        %v908 = vadd.f32 %v840, %v876
        %v909 = vadd.f32 %v841, %v877
        %v910 = vadd.f32 %v842, %v878
        %v911 = vadd.f32 %v843, %v879
        %v912 = vadd.f32 %v844, %v880
        %v913 = vadd.f32 %v845, %v881
        %v914 = vadd.f32 %v846, %v882
        %v915 = vadd.f32 %v847, %v883
        %v916 = vadd.f32 %v848, %v884
        %v917 = vadd.f32 %v849, %v885
        %v918 = vadd.f32 %v850, %v886
        %v919 = vadd.f32 %v851, %v887
        %v920 = vadd.f32 %v852, %v888
        %v921 = vadd.f32 %v853, %v889
        %v922 = vadd.f32 %v854, %v890
        %v923 = vadd.f32 %v855, %v891
        %v924 = vadd.f32 %v856, %v892
        %v925 = vadd.f32 %v857, %v893
        %v926 = vadd.f32 %v858, %v894
        %v927 = vlaneseq
        %v928 = vshrl.u32 %v927, 7
        %v929 = vsub.s32 0, %v928
        %v930 = vrot.slane %v306, %v929
        %v931 = vmul.f32 %v759, %v930
        %v932 = vmul.f32 %v760, %v930
        %v933 = vmul.f32 %v761, %v930
        %v934 = vmul.f32 %v762, %v930
        %v935 = vmul.f32 %v763, %v930
        %v936 = vmul.f32 %v764, %v930
        %v937 = vmul.f32 %v765, %v930
        %v938 = vmul.f32 %v766, %v930
        %v939 = vmul.f32 %v767, %v930
        %v940 = vmul.f32 %v768, %v930
        %v941 = vmul.f32 %v769, %v930
        %v942 = vmul.f32 %v770, %v930
        %v943 = vmul.f32 %v771, %v930
        %v944 = vmul.f32 %v772, %v930
        %v945 = vmul.f32 %v773, %v930
        %v946 = vmul.f32 %v774, %v930
        %v947 = vmul.f32 %v775, %v930
        %v948 = vmul.f32 %v776, %v930
        %v949 = vmul.f32 %v777, %v930
        %v950 = vmul.f32 %v778, %v930
        %v951 = vmul.f32 %v779, %v930
        %v952 = vmul.f32 %v780, %v930
        %v953 = vmul.f32 %v781, %v930
        %v954 = vmul.f32 %v782, %v930
        %v955 = vmul.f32 %v783, %v930
        %v956 = vmul.f32 %v784, %v930
        %v957 = vmul.f32 %v785, %v930
        %v958 = vmul.f32 %v786, %v930
        %v959 = vmul.f32 %v787, %v930
        %v960 = vmul.f32 %v788, %v930
        %v961 = vmul.f32 %v789, %v930
        %v962 = vmul.f32 %v790, %v930
        %v963 = vadd.f32 %v895, %v931
        %v964 = vadd.f32 %v896, %v932
        %v965 = vadd.f32 %v897, %v933
        %v966 = vadd.f32 %v898, %v934
        %v967 = vadd.f32 %v899, %v935
        %v968 = vadd.f32 %v900, %v936
        %v969 = vadd.f32 %v901, %v937
        %v970 = vadd.f32 %v902, %v938
        %v971 = vadd.f32 %v903, %v939
        %v972 = vadd.f32 %v904, %v940
        %v973 = vadd.f32 %v905, %v941
        %v974 = vadd.f32 %v906, %v942
        %v975 = vadd.f32 %v907, %v943
        %v976 = vadd.f32 %v908, %v944
        %v977 = vadd.f32 %v909, %v945
        %v978 = vadd.f32 %v910, %v946
        %v979 = vadd.f32 %v911, %v947
        %v980 = vadd.f32 %v912, %v948
        %v981 = vadd.f32 %v913, %v949
        %v982 = vadd.f32 %v914, %v950
        %v983 = vadd.f32 %v915, %v951
        %v984 = vadd.f32 %v916, %v952
        %v985 = vadd.f32 %v917, %v953
        %v986 = vadd.f32 %v918, %v954
        %v987 = vadd.f32 %v919, %v955
        %v988 = vadd.f32 %v920, %v956
        %v989 = vadd.f32 %v921, %v957
        %v990 = vadd.f32 %v922, %v958
        %v991 = vadd.f32 %v923, %v959
        %v992 = vadd.f32 %v924, %v960
        %v993 = vadd.f32 %v925, %v961
        %v994 = vadd.f32 %v926, %v962
        %995 = vst [vmem:[%s200] sm:$0xff] %v963
        %996 = vst [vmem:[%s200 + $0x8] sm:$0xff] %v964
        %997 = vst [vmem:[%s200 + $0x10] sm:$0xff] %v965
        %998 = vst [vmem:[%s200 + $0x18] sm:$0xff] %v966
        %999 = vst [vmem:[%s200 + $0x20] sm:$0xff] %v967
        %1000 = vst [vmem:[%s200 + $0x28] sm:$0xff] %v968
        %1001 = vst [vmem:[%s200 + $0x30] sm:$0xff] %v969
        %1002 = vst [vmem:[%s200 + $0x38] sm:$0xff] %v970
        %1003 = vst [vmem:[%s200 + $0x40] sm:$0xff] %v971
        %1004 = vst [vmem:[%s200 + $0x48] sm:$0xff] %v972
        %1005 = vst [vmem:[%s200 + $0x50] sm:$0xff] %v973
        %1006 = vst [vmem:[%s200 + $0x58] sm:$0xff] %v974
        %1007 = vst [vmem:[%s200 + $0x60] sm:$0xff] %v975
        %1008 = vst [vmem:[%s200 + $0x68] sm:$0xff] %v976
        %1009 = vst [vmem:[%s200 + $0x70] sm:$0xff] %v977
        %1010 = vst [vmem:[%s200 + $0x78] sm:$0xff] %v978
        %1011 = vst [vmem:[%s200 + $0x80] sm:$0xff] %v979
        %1012 = vst [vmem:[%s200 + $0x88] sm:$0xff] %v980
        %1013 = vst [vmem:[%s200 + $0x90] sm:$0xff] %v981
        %1014 = vst [vmem:[%s200 + $0x98] sm:$0xff] %v982
        %1015 = vst [vmem:[%s200 + $0xa0] sm:$0xff] %v983
        %1016 = vst [vmem:[%s200 + $0xa8] sm:$0xff] %v984
        %1017 = vst [vmem:[%s200 + $0xb0] sm:$0xff] %v985
        %1018 = vst [vmem:[%s200 + $0xb8] sm:$0xff] %v986
        %1019 = vst [vmem:[%s200 + $0xc0] sm:$0xff] %v987
        %1020 = vst [vmem:[%s200 + $0xc8] sm:$0xff] %v988
        %1021 = vst [vmem:[%s200 + $0xd0] sm:$0xff] %v989
        %1022 = vst [vmem:[%s200 + $0xd8] sm:$0xff] %v990
        %1023 = vst [vmem:[%s200 + $0xe0] sm:$0xff] %v991
        %1024 = vst [vmem:[%s200 + $0xe8] sm:$0xff] %v992
        %1025 = vst [vmem:[%s200 + $0xf0] sm:$0xff] %v993
        %1026 = vst [vmem:[%s200 + $0xf8] sm:$0xff] %v994
        %s1027 = sand.u32 %s96, 1
        %s1028 = scalar_lea.sflag [#allocation5], %s1027
        %s1029 = sand.u32 %s96, 1
        %s1030 = smul.addr %s1029, 256
        %s1031 = scalar_lea.vmem [#allocation8], %s1030
        // Predicated region
        $region37: #{tpu_custom_call.1} parent=27 // pred_check
          %p1032 = pneg %p106
        $region38: #{tpu_custom_call.1} parent=27 // pred_check_branch
          %1034 = sbr.rel (%p1032) target = $region40
        $region39: #{tpu_custom_call.1} parent=27 // pred_region
          %s1036 = ssub.s32 4096, 4096
          %1037 = vsyncadd %s1028, %s1036
          %s1038 = smul.addr %s24, 32
          %s1039 = sadd.s32 %s25, %s1038
          %s1040 = smul.addr %s1039, 128
          %s1041 = scalar_lea.hbm %s2, %s1040
          %s1042 = sshll.u32 %s1031, 4
          %s1043 = int_to_ptr.vmem [resolvable:$true] %s1042
          %1048 = dma.vmem_to_hbm [thread:$0]  %s1043, 4096, %s1041, %s1028, 128, 128, 8
        $region40: #{tpu_custom_call.1} parent=27 // pred_fallthru
          _
      $region28: #{tpu_custom_call.1} parent=5 // pred_fallthru
        _
      %p1049 = scmp.le.s32.totalorder 2, %s15
      // Predicated region
      $region41: #{tpu_custom_call.1} parent=5 // pred_check
        %p1050 = pneg %p1049
      $region42: #{tpu_custom_call.1} parent=5 // pred_check_branch
        %1052 = sbr.rel (%p1050) target = $region44
      $region43: #{tpu_custom_call.1} parent=5 // pred_region
        %s1053 = ssub.s32 %s15, 2
        // Predicated region
        $region45: #{tpu_custom_call.1} parent=43 // pred_check
          %p1054 = pneg %p112
        $region46: #{tpu_custom_call.1} parent=43 // pred_check_branch
          %1056 = sbr.rel (%p1054) target = $region48
        $region47: #{tpu_custom_call.1} parent=43 // pred_region
          %s1057 = sand.u32 %s97, 1
          %s1058 = scalar_lea.sflag [#allocation5], %s1057
          %s1059 = sand.u32 %s97, 1
          %s1060 = smul.addr %s1059, 256
          %s1061 = scalar_lea.vmem [#allocation8], %s1060
          %1062 = dma.done %s1058, 4096
        $region48: #{tpu_custom_call.1} parent=43 // pred_fallthru
          _
      $region44: #{tpu_custom_call.1} parent=5 // pred_fallthru
        _
    $region6: #{tpu_custom_call.1} parent=1 // loop_footer
      %s19 = sadd.s32 1, %s15
    $region7: #{tpu_custom_call.1} parent=1 // loop_footer_branch
      %14 = sbr.rel target = $region3
    $region8: #{tpu_custom_call.1} parent=1 // loop_exit
      _
    %1063 = vsyncpa [#allocation4], 1
    %s1064 = scalar_lea.sflag [#allocation4], 1
    %1065 = vsyncpa %s1064, 1
    %1066 = vsyncpa [#allocation7], 1
    %1067 = vsyncpa [#allocation5], 1
    %s1068 = scalar_lea.sflag [#allocation5], 1
    %1069 = vsyncpa %s1068, 1

</llo_original>
